<compile_context>
chip_gen: v5e
topology: v5e:2x2
jax: 0.10.0
libtpu: 0.0.40
codegen_flags: <defaults>
</compile_context>

<pallas_src>
import functools

import jax
import jax.numpy as jnp
from jax import lax
from jax.experimental import pallas as pl
from jax.experimental.pallas import tpu as pltpu


def _round_up(x, m):
    return (x + m - 1) // m * m


# ----------------------------- Pallas kernel ------------------------------- #
def _make_kernel(TQ, OWs, DH, DW, CI, LANE_pad, base_h, base_w):
    TM = TQ * OWs

    def kernel(x_ref, w_ref, b_ref, x2_ref, o_ref):
        # x_ref : (1, Hp, Wp, CI)        halo-padded NHWC input (resident per n)
        # w_ref : (DH*DW, CI, LANE_pad)  per-tap, phase-lane-packed weights (resident)
        # b_ref : (1, LANE_pad)          phase-lane-packed bias (resident)
        # x2_ref: (1, TM, LANE_pad)      residual row band, phase-lane-packed
        # o_ref : (1, TM, LANE_pad)
        q0 = pl.program_id(1) * TQ
        # bias + residual folded into the f32 accumulator init (no per-phase
        # re-broadcasts, no epilogue adds).
        acc = x2_ref[0] + b_ref[...]
        for jh in range(DH):                         # static unroll over halo taps
            for jw in range(DW):
                win = x_ref[0, pl.ds(q0 + base_h + jh, TQ),
                            pl.ds(base_w + jw, OWs), :]          # (TQ, OWs, CI)
                acc = acc + jnp.dot(win.reshape(TM, CI),
                                    w_ref[jh * DW + jw],
                                    preferred_element_type=jnp.float32)
        o_ref[0] = jnp.maximum(acc, 0.0).astype(o_ref.dtype)

    return kernel


# ------------------------- ConvTransposeAddReLU2d --------------------------- #
@functools.partial(
    jax.jit,
    static_argnames=("stride", "padding", "output_padding", "compute_dtype"))
def conv_transpose_add_relu2d(x1, x2, weight, bias, *, stride, padding,
                              output_padding, compute_dtype=jnp.bfloat16):
    """relu(conv_transpose2d(x1, weight, bias) + x2).

    x1:     (N, CI, H, W)    float32, NCHW
    x2:     (N, CO, OH, OW)  float32, NCHW
    weight: (CI, CO, KH, KW) PyTorch ConvTranspose2d weight layout
    bias:   (CO,)
    compute_dtype: dtype of the x1/weight MXU streams (bf16 halves HBM/VMEM and
                   runs the MXU at native rate; accumulation stays f32).
    """
    N, CI, H, W = x1.shape
    _, CO, KH, KW = weight.shape
    s, p, op = stride, padding, output_padding
    OH = (H - 1) * s - 2 * p + KH + op
    OW = (W - 1) * s - 2 * p + KW + op
    assert x2.shape == (N, CO, OH, OW)
    # Sub-pixel phase decomposition needs phase-complete output rows/cols.
    assert OH % s == 0 and OW % s == 0, "OH/OW must be divisible by stride"

    OHs, OWs = OH // s, OW // s
    M_ph = OHs * OWs
    LANE = s * s * CO
    LANE_pad = _round_up(LANE, 128)

    # --- halo geometry ---------------------------------------------------------
    # out row oh = q*s + r reads input row ih = q + dh with dh = (r + p - kh)/s,
    # kh = r + p - s*dh in [0, KH). The union of dh over all phases is contiguous.
    dhs = [(r + p - kh) // s for r in range(s) for kh in range(KH)
           if (r + p - kh) % s == 0]
    dws = [(c + p - kw) // s for c in range(s) for kw in range(KW)
           if (c + p - kw) % s == 0]
    dmin_h, dmax_h = min(dhs), max(dhs)
    dmin_w, dmax_w = min(dws), max(dws)
    DH = dmax_h - dmin_h + 1
    DW = dmax_w - dmin_w + 1

    pad_t = max(0, -dmin_h)
    pad_b = max(0, (OHs - 1) + dmax_h - (H - 1))
    pad_l = max(0, -dmin_w)
    pad_r = max(0, (OWs - 1) + dmax_w - (W - 1))
    Hp, Wp = H + pad_t + pad_b, W + pad_l + pad_r
    base_h, base_w = dmin_h + pad_t, dmin_w + pad_l

    # --- per-tap, phase-lane-packed weights -------------------------------------
    # w_taps[jh*DW + jw, ci, (r*s + c)*CO + co] = weight[ci, co, kh, kw]
    #   with kh = r + p - s*(dmin_h + jh), kw = c + p - s*(dmin_w + jw); else 0.
    w_taps = jnp.zeros((DH, DW, CI, s * s, CO), jnp.float32)
    for r in range(s):
        for c in range(s):
            for jh in range(DH):
                kh = r + p - s * (dmin_h + jh)
                if not 0 <= kh < KH:
                    continue
                for jw in range(DW):
                    kw = c + p - s * (dmin_w + jw)
                    if not 0 <= kw < KW:
                        continue
                    w_taps = w_taps.at[jh, jw, :, r * s + c, :].set(
                        weight[:, :, kh, kw])
    w_taps = w_taps.reshape(DH * DW, CI, LANE)
    w_taps = jnp.pad(w_taps, ((0, 0), (0, 0), (0, LANE_pad - LANE)))
    w_taps = w_taps.astype(compute_dtype)

    bias_p = jnp.pad(jnp.tile(bias.astype(jnp.float32), s * s),
                     (0, LANE_pad - LANE)).reshape(1, LANE_pad)

    # --- layout glue (single pass each; no zero-inserted / im2col tensors) ------
    x1_nhwc = jnp.transpose(x1, (0, 2, 3, 1))                    # (N, H, W, CI)
    x1p = jnp.pad(x1_nhwc, ((0, 0), (pad_t, pad_b), (pad_l, pad_r), (0, 0)))
    x1p = x1p.astype(compute_dtype)

    x2_p = x2.reshape(N, CO, OHs, s, OWs, s)
    x2_p = jnp.transpose(x2_p, (0, 2, 4, 3, 5, 1))               # (N, q, u, r, c, CO)
    x2_p = x2_p.reshape(N, M_ph, LANE)
    x2_p = jnp.pad(x2_p, ((0, 0), (0, 0), (0, LANE_pad - LANE)))

    # --- row tiling: f32 accumulator (TM, LANE_pad) capped at ~128 KiB ----------
    tm_cap = max(8, (128 * 1024) // (4 * LANE_pad))
    TQ = OHs                                  # fallback: one full-dim tile
    for d in sorted([d for d in range(1, OHs + 1) if OHs % d == 0], reverse=True):
        if d * OWs <= tm_cap and (d * OWs) % 8 == 0:
            TQ = d
            break
    n_qt = OHs // TQ
    TM = TQ * OWs

    # --- VMEM budget -------------------------------------------------------------
    def _blk_bytes(shape, itemsize):
        dims = list(shape)
        dims[-1] = _round_up(dims[-1], 128)
        if len(dims) >= 2:
            dims[-2] = _round_up(dims[-2], 8)
        n = 1
        for d in dims:
            n *= d
        return n * itemsize

    csize = jnp.dtype(compute_dtype).itemsize
    vmem_est = 2 * (_blk_bytes((1, Hp, Wp, CI), csize)
                    + _blk_bytes((DH * DW, CI, LANE_pad), csize)
                    + _blk_bytes((1, LANE_pad), 4)
                    + 2 * _blk_bytes((1, TM, LANE_pad), 4))
    vmem_limit = min(100 * 1024 * 1024,
                     max(32 * 1024 * 1024, int(1.5 * vmem_est)))

    kernel = _make_kernel(TQ, OWs, DH, DW, CI, LANE_pad, base_h, base_w)

    out_p = pl.pallas_call(
        kernel,
        out_shape=jax.ShapeDtypeStruct((N, M_ph, LANE_pad), jnp.float32),
        grid=(N, n_qt),
        in_specs=[
            pl.BlockSpec((1, Hp, Wp, CI), lambda n, q: (n, 0, 0, 0)),
            pl.BlockSpec((DH * DW, CI, LANE_pad), lambda n, q: (0, 0, 0)),
            pl.BlockSpec((1, LANE_pad), lambda n, q: (0, 0)),
            pl.BlockSpec((1, TM, LANE_pad), lambda n, q: (n, q, 0)),
        ],
        out_specs=pl.BlockSpec((1, TM, LANE_pad), lambda n, q: (n, q, 0)),
        compiler_params=pltpu.CompilerParams(
            dimension_semantics=("parallel", "parallel"),
            vmem_limit_bytes=vmem_limit,
        ),
    )(x1p, w_taps, bias_p, x2_p)

    # Phase de-interleave (depth-to-space) back to NCHW; the :LANE slice fuses
    # into this unavoidable layout copy.
    out = out_p[..., :LANE].reshape(N, OHs, OWs, s, s, CO)
    out = jnp.transpose(out, (0, 5, 1, 3, 2, 4))                 # (N, CO, q, r, u, c)
    return out.reshape(N, CO, OH, OW)


# ----------------------------------- main ----------------------------------- #
if __name__ == "__main__":
    # ConvTranspose2d(CI, CO, k=4, stride=2, padding=1) -> add -> ReLU.
    N, CI, CO = 2, 4, 8
    H = W = 8
    KH = KW = 4
    STRIDE, PADDING, OUTPUT_PADDING = 2, 1, 0
    OH = (H - 1) * STRIDE - 2 * PADDING + KH + OUTPUT_PADDING    # 16
    OW = (W - 1) * STRIDE - 2 * PADDING + KW + OUTPUT_PADDING    # 16

    key = jax.random.PRNGKey(0)
    k1, k2, k3, k4 = jax.random.split(key, 4)
    x1 = jax.random.normal(k1, (N, CI, H, W), dtype=jnp.float32)
    x2 = jax.random.normal(k2, (N, CO, OH, OW), dtype=jnp.float32)
    weight = 0.1 * jax.random.normal(k3, (CI, CO, KH, KW), dtype=jnp.float32)
    bias = 0.1 * jax.random.normal(k4, (CO,), dtype=jnp.float32)

    # Reference: conv_transpose == lhs-dilated conv with spatially flipped weight.
    w_conv = jnp.transpose(weight[:, :, ::-1, ::-1], (1, 0, 2, 3))  # OIHW
    ref = lax.conv_general_dilated(
        x1, w_conv,
        window_strides=(1, 1),
        padding=[(KH - 1 - PADDING, KH - 1 - PADDING + OUTPUT_PADDING),
                 (KW - 1 - PADDING, KW - 1 - PADDING + OUTPUT_PADDING)],
        lhs_dilation=(STRIDE, STRIDE),
        dimension_numbers=("NCHW", "OIHW", "NCHW"),
    ) + bias.reshape(1, CO, 1, 1)
    ref = jnp.maximum(ref + x2, 0.0)

    # Exact path (f32 MXU streams): tight tolerance.
    out_f32 = conv_transpose_add_relu2d(
        x1, x2, weight, bias,
        stride=STRIDE, padding=PADDING, output_padding=OUTPUT_PADDING,
        compute_dtype=jnp.float32)
    out_f32 = jax.block_until_ready(out_f32)
    assert out_f32.shape == (N, CO, OH, OW)
    err32 = float(jnp.max(jnp.abs(out_f32 - ref)))
    assert err32 < 1e-4, f"f32 path max abs err {err32}"

    # Default path (bf16 x1/weight streams, f32 accumulation): bf16 tolerance.
    out_bf16 = conv_transpose_add_relu2d(
        x1, x2, weight, bias,
        stride=STRIDE, padding=PADDING, output_padding=OUTPUT_PADDING)
    out_bf16 = jax.block_until_ready(out_bf16)
    assert out_bf16.shape == (N, CO, OH, OW)
    err16 = float(jnp.max(jnp.abs(out_bf16 - ref)))
    assert err16 < 5e-2, f"bf16 path max abs err {err16}"

    print("KERNEL_OK")
</pallas_src>

<mosaic_0001>
module attributes {stable_mosaic.version = 11 : i64} {
  func.func @kernel(%arg0: i32, %arg1: i32, %arg2: memref<1x10x10x4xf32, #tpu.memory_space<vmem>>, %arg3: memref<9x4x128xf32, #tpu.memory_space<vmem>>, %arg4: memref<1x128xf32, #tpu.memory_space<vmem>>, %arg5: memref<1x64x128xf32, #tpu.memory_space<vmem>>, %arg6: memref<1x64x128xf32, #tpu.memory_space<vmem>>) attributes {dimension_semantics = [#tpu.dimension_semantics<parallel>, #tpu.dimension_semantics<parallel>], iteration_bounds = array<i64: 2, 1>, scalar_prefetch = 0 : i64, scratch_operands = 0 : i64, tpu.core_type = #tpu.core_type<tc>, window_params = [{transform_indices = @transform_0, window_bounds = array<i64: 1, 10, 10, 4>}, {pipeline_mode = #tpu.pipeline_mode<synchronous>, transform_indices = @transform_1, window_bounds = array<i64: 9, 4, 128>}, {pipeline_mode = #tpu.pipeline_mode<synchronous>, transform_indices = @transform_2, window_bounds = array<i64: 1, 128>}, {transform_indices = @transform_3, window_bounds = array<i64: 1, 64, 128>}, {transform_indices = @transform_4, window_bounds = array<i64: 1, 64, 128>}]} {
    %c8_i32 = arith.constant 8 : i32
    %0 = arith.muli %arg1, %c8_i32 : i32
    %c0 = arith.constant 0 : index
    %c0_0 = arith.constant 0 : index
    %c0_1 = arith.constant 0 : index
    %1 = vector.load %arg5[%c0, %c0_0, %c0_1] : memref<1x64x128xf32, #tpu.memory_space<vmem>>, vector<1x64x128xf32>
    %2 = vector.shape_cast %1 : vector<1x64x128xf32> to vector<64x128xf32>
    %c0_2 = arith.constant 0 : index
    %c0_3 = arith.constant 0 : index
    %3 = vector.load %arg4[%c0_2, %c0_3] : memref<1x128xf32, #tpu.memory_space<vmem>>, vector<1x128xf32>
    %4 = vector.broadcast %3 : vector<1x128xf32> to vector<64x128xf32>
    %5 = arith.addf %2, %4 : vector<64x128xf32>
    %c0_i32 = arith.constant 0 : i32
    %6 = arith.addi %0, %c0_i32 : i32
    %c0_i32_4 = arith.constant 0 : i32
    %7 = arith.addi %6, %c0_i32_4 : i32
    %c0_5 = arith.constant 0 : index
    %8 = arith.index_cast %7 : i32 to index
    %c0_6 = arith.constant 0 : index
    %c0_7 = arith.constant 0 : index
    %9 = vector.load %arg2[%c0_5, %8, %c0_6, %c0_7] : memref<1x10x10x4xf32, #tpu.memory_space<vmem>>, vector<1x8x8x4xf32>
    %10 = vector.shape_cast %9 : vector<1x8x8x4xf32> to vector<8x8x4xf32>
    %11 = vector.shape_cast %10 : vector<8x8x4xf32> to vector<64x4xf32>
    %c0_8 = arith.constant 0 : index
    %c0_9 = arith.constant 0 : index
    %c0_10 = arith.constant 0 : index
    %12 = vector.load %arg3[%c0_8, %c0_9, %c0_10] : memref<9x4x128xf32, #tpu.memory_space<vmem>>, vector<1x4x128xf32>
    %13 = vector.shape_cast %12 : vector<1x4x128xf32> to vector<4x128xf32>
    %cst = arith.constant dense<0.000000e+00> : vector<64x128xf32>
    %14 = tpu.matmul %11, %13, %cst {dimension_numbers = #tpu.dot_dimension_numbers<[1], [0], [0], [1], [0, 0, 1, 1], [], []>} : vector<64x4xf32>, vector<4x128xf32>, vector<64x128xf32> -> vector<64x128xf32>
    %15 = arith.addf %5, %14 : vector<64x128xf32>
    %c0_i32_11 = arith.constant 0 : i32
    %16 = arith.addi %0, %c0_i32_11 : i32
    %c0_i32_12 = arith.constant 0 : i32
    %17 = arith.addi %16, %c0_i32_12 : i32
    %c0_13 = arith.constant 0 : index
    %18 = arith.index_cast %17 : i32 to index
    %c1 = arith.constant 1 : index
    %c0_14 = arith.constant 0 : index
    %19 = vector.load %arg2[%c0_13, %18, %c1, %c0_14] : memref<1x10x10x4xf32, #tpu.memory_space<vmem>>, vector<1x8x8x4xf32>
    %20 = vector.shape_cast %19 : vector<1x8x8x4xf32> to vector<8x8x4xf32>
    %21 = vector.shape_cast %20 : vector<8x8x4xf32> to vector<64x4xf32>
    %c1_15 = arith.constant 1 : index
    %c0_16 = arith.constant 0 : index
    %c0_17 = arith.constant 0 : index
    %22 = vector.load %arg3[%c1_15, %c0_16, %c0_17] : memref<9x4x128xf32, #tpu.memory_space<vmem>>, vector<1x4x128xf32>
    %23 = vector.shape_cast %22 : vector<1x4x128xf32> to vector<4x128xf32>
    %cst_18 = arith.constant dense<0.000000e+00> : vector<64x128xf32>
    %24 = tpu.matmul %21, %23, %cst_18 {dimension_numbers = #tpu.dot_dimension_numbers<[1], [0], [0], [1], [0, 0, 1, 1], [], []>} : vector<64x4xf32>, vector<4x128xf32>, vector<64x128xf32> -> vector<64x128xf32>
    %25 = arith.addf %15, %24 : vector<64x128xf32>
    %c0_i32_19 = arith.constant 0 : i32
    %26 = arith.addi %0, %c0_i32_19 : i32
    %c0_i32_20 = arith.constant 0 : i32
    %27 = arith.addi %26, %c0_i32_20 : i32
    %c0_21 = arith.constant 0 : index
    %28 = arith.index_cast %27 : i32 to index
    %c2 = arith.constant 2 : index
    %c0_22 = arith.constant 0 : index
    %29 = vector.load %arg2[%c0_21, %28, %c2, %c0_22] : memref<1x10x10x4xf32, #tpu.memory_space<vmem>>, vector<1x8x8x4xf32>
    %30 = vector.shape_cast %29 : vector<1x8x8x4xf32> to vector<8x8x4xf32>
    %31 = vector.shape_cast %30 : vector<8x8x4xf32> to vector<64x4xf32>
    %c2_23 = arith.constant 2 : index
    %c0_24 = arith.constant 0 : index
    %c0_25 = arith.constant 0 : index
    %32 = vector.load %arg3[%c2_23, %c0_24, %c0_25] : memref<9x4x128xf32, #tpu.memory_space<vmem>>, vector<1x4x128xf32>
    %33 = vector.shape_cast %32 : vector<1x4x128xf32> to vector<4x128xf32>
    %cst_26 = arith.constant dense<0.000000e+00> : vector<64x128xf32>
    %34 = tpu.matmul %31, %33, %cst_26 {dimension_numbers = #tpu.dot_dimension_numbers<[1], [0], [0], [1], [0, 0, 1, 1], [], []>} : vector<64x4xf32>, vector<4x128xf32>, vector<64x128xf32> -> vector<64x128xf32>
    %35 = arith.addf %25, %34 : vector<64x128xf32>
    %c0_i32_27 = arith.constant 0 : i32
    %36 = arith.addi %0, %c0_i32_27 : i32
    %c1_i32 = arith.constant 1 : i32
    %37 = arith.addi %36, %c1_i32 : i32
    %c0_28 = arith.constant 0 : index
    %38 = arith.index_cast %37 : i32 to index
    %c0_29 = arith.constant 0 : index
    %c0_30 = arith.constant 0 : index
    %39 = vector.load %arg2[%c0_28, %38, %c0_29, %c0_30] : memref<1x10x10x4xf32, #tpu.memory_space<vmem>>, vector<1x8x8x4xf32>
    %40 = vector.shape_cast %39 : vector<1x8x8x4xf32> to vector<8x8x4xf32>
    %41 = vector.shape_cast %40 : vector<8x8x4xf32> to vector<64x4xf32>
    %c3 = arith.constant 3 : index
    %c0_31 = arith.constant 0 : index
    %c0_32 = arith.constant 0 : index
    %42 = vector.load %arg3[%c3, %c0_31, %c0_32] : memref<9x4x128xf32, #tpu.memory_space<vmem>>, vector<1x4x128xf32>
    %43 = vector.shape_cast %42 : vector<1x4x128xf32> to vector<4x128xf32>
    %cst_33 = arith.constant dense<0.000000e+00> : vector<64x128xf32>
    %44 = tpu.matmul %41, %43, %cst_33 {dimension_numbers = #tpu.dot_dimension_numbers<[1], [0], [0], [1], [0, 0, 1, 1], [], []>} : vector<64x4xf32>, vector<4x128xf32>, vector<64x128xf32> -> vector<64x128xf32>
    %45 = arith.addf %35, %44 : vector<64x128xf32>
    %c0_i32_34 = arith.constant 0 : i32
    %46 = arith.addi %0, %c0_i32_34 : i32
    %c1_i32_35 = arith.constant 1 : i32
    %47 = arith.addi %46, %c1_i32_35 : i32
    %c0_36 = arith.constant 0 : index
    %48 = arith.index_cast %47 : i32 to index
    %c1_37 = arith.constant 1 : index
    %c0_38 = arith.constant 0 : index
    %49 = vector.load %arg2[%c0_36, %48, %c1_37, %c0_38] : memref<1x10x10x4xf32, #tpu.memory_space<vmem>>, vector<1x8x8x4xf32>
    %50 = vector.shape_cast %49 : vector<1x8x8x4xf32> to vector<8x8x4xf32>
    %51 = vector.shape_cast %50 : vector<8x8x4xf32> to vector<64x4xf32>
    %c4 = arith.constant 4 : index
    %c0_39 = arith.constant 0 : index
    %c0_40 = arith.constant 0 : index
    %52 = vector.load %arg3[%c4, %c0_39, %c0_40] : memref<9x4x128xf32, #tpu.memory_space<vmem>>, vector<1x4x128xf32>
    %53 = vector.shape_cast %52 : vector<1x4x128xf32> to vector<4x128xf32>
    %cst_41 = arith.constant dense<0.000000e+00> : vector<64x128xf32>
    %54 = tpu.matmul %51, %53, %cst_41 {dimension_numbers = #tpu.dot_dimension_numbers<[1], [0], [0], [1], [0, 0, 1, 1], [], []>} : vector<64x4xf32>, vector<4x128xf32>, vector<64x128xf32> -> vector<64x128xf32>
    %55 = arith.addf %45, %54 : vector<64x128xf32>
    %c0_i32_42 = arith.constant 0 : i32
    %56 = arith.addi %0, %c0_i32_42 : i32
    %c1_i32_43 = arith.constant 1 : i32
    %57 = arith.addi %56, %c1_i32_43 : i32
    %c0_44 = arith.constant 0 : index
    %58 = arith.index_cast %57 : i32 to index
    %c2_45 = arith.constant 2 : index
    %c0_46 = arith.constant 0 : index
    %59 = vector.load %arg2[%c0_44, %58, %c2_45, %c0_46] : memref<1x10x10x4xf32, #tpu.memory_space<vmem>>, vector<1x8x8x4xf32>
    %60 = vector.shape_cast %59 : vector<1x8x8x4xf32> to vector<8x8x4xf32>
    %61 = vector.shape_cast %60 : vector<8x8x4xf32> to vector<64x4xf32>
    %c5 = arith.constant 5 : index
    %c0_47 = arith.constant 0 : index
    %c0_48 = arith.constant 0 : index
    %62 = vector.load %arg3[%c5, %c0_47, %c0_48] : memref<9x4x128xf32, #tpu.memory_space<vmem>>, vector<1x4x128xf32>
    %63 = vector.shape_cast %62 : vector<1x4x128xf32> to vector<4x128xf32>
    %cst_49 = arith.constant dense<0.000000e+00> : vector<64x128xf32>
    %64 = tpu.matmul %61, %63, %cst_49 {dimension_numbers = #tpu.dot_dimension_numbers<[1], [0], [0], [1], [0, 0, 1, 1], [], []>} : vector<64x4xf32>, vector<4x128xf32>, vector<64x128xf32> -> vector<64x128xf32>
    %65 = arith.addf %55, %64 : vector<64x128xf32>
    %c0_i32_50 = arith.constant 0 : i32
    %66 = arith.addi %0, %c0_i32_50 : i32
    %c2_i32 = arith.constant 2 : i32
    %67 = arith.addi %66, %c2_i32 : i32
    %c0_51 = arith.constant 0 : index
    %68 = arith.index_cast %67 : i32 to index
    %c0_52 = arith.constant 0 : index
    %c0_53 = arith.constant 0 : index
    %69 = vector.load %arg2[%c0_51, %68, %c0_52, %c0_53] : memref<1x10x10x4xf32, #tpu.memory_space<vmem>>, vector<1x8x8x4xf32>
    %70 = vector.shape_cast %69 : vector<1x8x8x4xf32> to vector<8x8x4xf32>
    %71 = vector.shape_cast %70 : vector<8x8x4xf32> to vector<64x4xf32>
    %c6 = arith.constant 6 : index
    %c0_54 = arith.constant 0 : index
    %c0_55 = arith.constant 0 : index
    %72 = vector.load %arg3[%c6, %c0_54, %c0_55] : memref<9x4x128xf32, #tpu.memory_space<vmem>>, vector<1x4x128xf32>
    %73 = vector.shape_cast %72 : vector<1x4x128xf32> to vector<4x128xf32>
    %cst_56 = arith.constant dense<0.000000e+00> : vector<64x128xf32>
    %74 = tpu.matmul %71, %73, %cst_56 {dimension_numbers = #tpu.dot_dimension_numbers<[1], [0], [0], [1], [0, 0, 1, 1], [], []>} : vector<64x4xf32>, vector<4x128xf32>, vector<64x128xf32> -> vector<64x128xf32>
    %75 = arith.addf %65, %74 : vector<64x128xf32>
    %c0_i32_57 = arith.constant 0 : i32
    %76 = arith.addi %0, %c0_i32_57 : i32
    %c2_i32_58 = arith.constant 2 : i32
    %77 = arith.addi %76, %c2_i32_58 : i32
    %c0_59 = arith.constant 0 : index
    %78 = arith.index_cast %77 : i32 to index
    %c1_60 = arith.constant 1 : index
    %c0_61 = arith.constant 0 : index
    %79 = vector.load %arg2[%c0_59, %78, %c1_60, %c0_61] : memref<1x10x10x4xf32, #tpu.memory_space<vmem>>, vector<1x8x8x4xf32>
    %80 = vector.shape_cast %79 : vector<1x8x8x4xf32> to vector<8x8x4xf32>
    %81 = vector.shape_cast %80 : vector<8x8x4xf32> to vector<64x4xf32>
    %c7 = arith.constant 7 : index
    %c0_62 = arith.constant 0 : index
    %c0_63 = arith.constant 0 : index
    %82 = vector.load %arg3[%c7, %c0_62, %c0_63] : memref<9x4x128xf32, #tpu.memory_space<vmem>>, vector<1x4x128xf32>
    %83 = vector.shape_cast %82 : vector<1x4x128xf32> to vector<4x128xf32>
    %cst_64 = arith.constant dense<0.000000e+00> : vector<64x128xf32>
    %84 = tpu.matmul %81, %83, %cst_64 {dimension_numbers = #tpu.dot_dimension_numbers<[1], [0], [0], [1], [0, 0, 1, 1], [], []>} : vector<64x4xf32>, vector<4x128xf32>, vector<64x128xf32> -> vector<64x128xf32>
    %85 = arith.addf %75, %84 : vector<64x128xf32>
    %c0_i32_65 = arith.constant 0 : i32
    %86 = arith.addi %0, %c0_i32_65 : i32
    %c2_i32_66 = arith.constant 2 : i32
    %87 = arith.addi %86, %c2_i32_66 : i32
    %c0_67 = arith.constant 0 : index
    %88 = arith.index_cast %87 : i32 to index
    %c2_68 = arith.constant 2 : index
    %c0_69 = arith.constant 0 : index
    %89 = vector.load %arg2[%c0_67, %88, %c2_68, %c0_69] : memref<1x10x10x4xf32, #tpu.memory_space<vmem>>, vector<1x8x8x4xf32>
    %90 = vector.shape_cast %89 : vector<1x8x8x4xf32> to vector<8x8x4xf32>
    %91 = vector.shape_cast %90 : vector<8x8x4xf32> to vector<64x4xf32>
    %c8 = arith.constant 8 : index
    %c0_70 = arith.constant 0 : index
    %c0_71 = arith.constant 0 : index
    %92 = vector.load %arg3[%c8, %c0_70, %c0_71] : memref<9x4x128xf32, #tpu.memory_space<vmem>>, vector<1x4x128xf32>
    %93 = vector.shape_cast %92 : vector<1x4x128xf32> to vector<4x128xf32>
    %cst_72 = arith.constant dense<0.000000e+00> : vector<64x128xf32>
    %94 = tpu.matmul %91, %93, %cst_72 {dimension_numbers = #tpu.dot_dimension_numbers<[1], [0], [0], [1], [0, 0, 1, 1], [], []>} : vector<64x4xf32>, vector<4x128xf32>, vector<64x128xf32> -> vector<64x128xf32>
    %95 = arith.addf %85, %94 : vector<64x128xf32>
    %cst_73 = arith.constant 0.000000e+00 : f32
    %96 = vector.broadcast %cst_73 : f32 to vector<64x128xf32>
    %97 = arith.maximumf %95, %96 : vector<64x128xf32>
    %c0_74 = arith.constant 0 : index
    %c0_75 = arith.constant 0 : index
    %c0_76 = arith.constant 0 : index
    %98 = vector.load %arg6[%c0_74, %c0_75, %c0_76] : memref<1x64x128xf32, #tpu.memory_space<vmem>>, vector<1x64x128xf32>
    %99 = vector.shape_cast %98 : vector<1x64x128xf32> to vector<64x128xf32>
    %100 = vector.shape_cast %97 : vector<64x128xf32> to vector<1x64x128xf32>
    tpu.vector_store %arg6[%c0_74, %c0_75, %c0_76], %100 {strides = array<i32>} : memref<1x64x128xf32, #tpu.memory_space<vmem>>, vector<1x64x128xf32>,
    return
  }
  func.func @transform_0(%arg0: i32, %arg1: i32) -> (i32, i32, i32, i32) {
    %c0_i32 = arith.constant 0 : i32
    %c0_i32_0 = arith.constant 0 : i32
    %c0_i32_1 = arith.constant 0 : i32
    %c0_i32_2 = arith.constant 0 : i32
    return %arg0, %c0_i32, %c0_i32_0, %c0_i32_1 : i32, i32, i32, i32
  }
  func.func @transform_1(%arg0: i32, %arg1: i32) -> (i32, i32, i32) {
    %c0_i32 = arith.constant 0 : i32
    %c0_i32_0 = arith.constant 0 : i32
    %c0_i32_1 = arith.constant 0 : i32
    %c0_i32_2 = arith.constant 0 : i32
    return %c0_i32, %c0_i32_0, %c0_i32_1 : i32, i32, i32
  }
  func.func @transform_2(%arg0: i32, %arg1: i32) -> (i32, i32) {
    %c0_i32 = arith.constant 0 : i32
    %c0_i32_0 = arith.constant 0 : i32
    %c0_i32_1 = arith.constant 0 : i32
    return %c0_i32, %c0_i32_0 : i32, i32
  }
  func.func @transform_3(%arg0: i32, %arg1: i32) -> (i32, i32, i32) {
    %c0_i32 = arith.constant 0 : i32
    %c0_i32_0 = arith.constant 0 : i32
    return %arg0, %arg1, %c0_i32 : i32, i32, i32
  }
  func.func @transform_4(%arg0: i32, %arg1: i32) -> (i32, i32, i32) {
    %c0_i32 = arith.constant 0 : i32
    %c0_i32_0 = arith.constant 0 : i32
    return %arg0, %arg1, %c0_i32 : i32, i32, i32
  }
}

</mosaic_0001>

<llo_original>
// kernel: tile.8
$region0: #{tile.8}
  #allocation0 [shape = 's32[1]{0}', space=sflag, size = 0x4, scoped, tag = 'scoped memory for tile.8']
  %s0 = inlined_call_operand.vmem [shape: f32[8], index: 0, kind: input, shape index: {}]
  %s1 = inlined_call_operand.vmem [shape: f32[4,8], index: 1, kind: output, shape index: {}]
  // Predicated region
  $region2: #{tile.8} parent=0 // pred_check
    _
  $region3: #{tile.8} parent=0 // pred_check_branch
    %3 = sbr.rel (0) target = $region5
  $region4: #{tile.8} parent=0 // pred_region
    _
  $region5: #{tile.8} parent=0 // pred_fallthru
    _
  %v4 = vld [vmem:[%s0] ss:$0 sm:$0xff]
  %5 = vst [vmem:[%s1] sm:$0xf] %v4

// kernel: tile.9
$region0: #{tile.9}
  %s0 = inlined_call_operand.vmem [shape: f32[4,8], index: 0, kind: input, shape index: {}]
  %s1 = inlined_call_operand.vmem [shape: f32[32], index: 1, kind: output, shape index: {}]
  $region1: #{tile.9} parent=0
    #allocation0 [shape = 'u8[4096]{0}', space=vmem, size = 0x1000, scoped, tag = 'scoped mem for output reshape']
    #allocation1 [shape = 'u8[4096]{0}', space=vmem, size = 0x1000, scoped, tag = 'scoped mem for input reshape']
    %s3 = ssub.s32 16, 1
    %v4 = vld [vmem:[%s0] sm:%s3]
    %5 = vst [vmem:[#allocation1] sm:%s3] %v4
    %v6 = vld [vmem:[#allocation1] sm:$0x1]
    %vm7 = vcmask 64512
    %8 = vst.msk [vmem:[#allocation0] sm:$0x1] %vm7, %v6
    %s9 = scalar_lea.vmem [#allocation1], 3
    %v10 = vld [vmem:[%s9] sm:$0x1]
    %11 = vrot.lane.b32.xlu0 %v10, 24
    %v12 = vpop.permute.xlu0 %11
    %vm13 = vcmask 261312
    %14 = vst.msk [vmem:[#allocation0] sm:$0x1] %vm13, %v12
    %s15 = scalar_lea.vmem [#allocation1], 2
    %v16 = vld [vmem:[%s15] sm:$0x1]
    %17 = vrot.lane.b32.xlu0 %v16, 16
    %v18 = vpop.permute.xlu0 %17
    %vm19 = vcmask 195712
    %20 = vst.msk [vmem:[#allocation0] sm:$0x1] %vm19, %v18
    %s21 = scalar_lea.vmem [#allocation1], 1
    %v22 = vld [vmem:[%s21] sm:$0x1]
    %23 = vrot.lane.b32.xlu0 %v22, 8
    %v24 = vpop.permute.xlu0 %23
    %vm25 = vcmask 130112
    %26 = vst.msk [vmem:[#allocation0] sm:$0x1] %vm25, %v24
    %s28 = ssub.s32 2, 1
    %v29 = vld [vmem:[#allocation0] sm:%s28]
    %s31 = ssub.s32 2, 1
    %32 = vst [vmem:[%s1] sm:%s31] %v29

// kernel: conv_transpose_add_relu2d.1
$region0: #{conv_transpose_add_relu2d.1}
  #allocation0 [shape = 'u32[]', space=smem, size = 0x4, offset = 0x4, fixed_abs, tag = 'smem constant byte address 0x4 - core index']
  #allocation1 [shape = 'u32[72,128]{1,0:T(1,128)}', space=vmem, size = 0x9000, scoped, tag = 'internal scratch']
  %s0 = inlined_call_operand.vmem [shape: f32[2,10,10,4], index: 0, kind: input, shape index: {}]
  %s1 = inlined_call_operand.vmem [shape: f32[9,4,128], index: 1, kind: input, shape index: {}]
  %s2 = inlined_call_operand.vmem [shape: f32[1,128], index: 2, kind: input, shape index: {}]
  %s3 = inlined_call_operand.vmem [shape: f32[2,64,128], index: 3, kind: input, shape index: {}]
  %s4 = inlined_call_operand.vmem [shape: f32[2,64,128], index: 4, kind: output, shape index: {}]
  %s5 = sld [smem:[#allocation0]]
  $region49: #{conv_transpose_add_relu2d.1} parent=0
    _
  %s7 = ssub.s32 1, %s5
  %s8 = scalar_select 0, %s7, %s5
  loop: start=0, step=1, limit=4
  $region2: #{conv_transpose_add_relu2d.1} parent=0 // loop_pre_header
    _
  $region3: #{conv_transpose_add_relu2d.1} parent=0 // loop_header
    %s10 = sphi 0, %s14
    %p11 = scmp.ge.s32.totalorder %s10, 4
    %s17 = sphi 0, %s29
    %s18 = sphi 0, %s25
    %s19 = sphi 0, %s17
    %s20 = sphi 0, %s18
    %s21 = sphi 0, %s19
    %s22 = sphi 0, %s20
    %s32 = sphi 0, %s34
    %s35 = sphi 0, %s32
    %s36 = sphi 0, %s35
    %s52 = sphi 0, %s36
    %s56 = sphi 0, %s56
    %s58 = sphi 0, %s56
    %s59 = sphi 0, %s58
    %s73 = sphi 0, %s59
    %s77 = sphi 0, %s77
    %s79 = sphi 0, %s77
    %s80 = sphi 0, %s79
    %s94 = sphi 0, %s80
    %s102 = sphi 0, %s104
    %s105 = sphi 0, %s102
    %s106 = sphi 0, %s105
    %s122 = sphi 0, %s106
    %s130 = sphi 0, %s132
    %s133 = sphi 0, %s130
    %s134 = sphi 0, %s133
    %s150 = sphi 0, %s134
  $region4: #{conv_transpose_add_relu2d.1} parent=0 // loop_header_branch
    %13 = sbr.rel (%p11) target = $region8
  $region5: #{conv_transpose_add_relu2d.1} parent=0 // loop_body
    %s15 = ssub.s32 %s10, 1
    %s16 = ssub.s32 %s10, 2
    %s23 = sadd.s32 1, %s18
    %p24 = scmp.ge.s32.totalorder %s23, 1
    %s25 = scalar_select %p24, 0, %s23
    %s26 = sadd.s32 1, %s17
    %s27 = scalar_select %p24, %s26, %s17
    %p28 = scmp.ge.s32.totalorder %s27, 2
    %s29 = scalar_select %p28, 0, %s27
    %s30 = ssub.s32 %s17, %s29
    %p31 = scmp.eq.s32.totalorder %s30, 0
    %s33 = sadd.s32 %s32, 1
    %s34 = scalar_select %p31, %s32, %s33
    %p37 = pneg %p31
    %p38 = scmp.eq.s32.totalorder %s10, 1
    %p39 = por %p37, %p38
    %p40 = scmp.ne.s32.totalorder %s32, %s35
    %p41 = scmp.eq.s32.totalorder %s10, 0
    %p42 = por %p40, %p41
    %p43 = scmp.ne.s32.totalorder %s32, %s35
    %p44 = scmp.eq.s32.totalorder %s15, 1
    %p45 = por %p43, %p44
    %p46 = scmp.ne.s32.totalorder %s35, %s36
    %p47 = scmp.eq.s32.totalorder %s15, 0
    %p48 = por %p46, %p47
    %p49 = scmp.ne.s32.totalorder %s35, %s36
    %p50 = scmp.eq.s32.totalorder %s16, 1
    %p51 = por %p49, %p50
    %p53 = scmp.ne.s32.totalorder %s36, %s52
    %p54 = scmp.eq.s32.totalorder %s16, 0
    %p55 = por %p53, %p54
    %s57 = sadd.s32 %s56, 1
    %p60 = scmp.eq.s32.totalorder %s10, 1
    %p61 = scmp.ne.s32.totalorder %s56, %s58
    %p62 = scmp.eq.s32.totalorder %s10, 0
    %p63 = por %p61, %p62
    %p64 = scmp.ne.s32.totalorder %s56, %s58
    %p65 = scmp.eq.s32.totalorder %s15, 1
    %p66 = por %p64, %p65
    %p67 = scmp.ne.s32.totalorder %s58, %s59
    %p68 = scmp.eq.s32.totalorder %s15, 0
    %p69 = por %p67, %p68
    %p70 = scmp.ne.s32.totalorder %s58, %s59
    %p71 = scmp.eq.s32.totalorder %s16, 1
    %p72 = por %p70, %p71
    %p74 = scmp.ne.s32.totalorder %s59, %s73
    %p75 = scmp.eq.s32.totalorder %s16, 0
    %p76 = por %p74, %p75
    %s78 = sadd.s32 %s77, 1
    %p81 = scmp.eq.s32.totalorder %s10, 1
    %p82 = scmp.ne.s32.totalorder %s77, %s79
    %p83 = scmp.eq.s32.totalorder %s10, 0
    %p84 = por %p82, %p83
    %p85 = scmp.ne.s32.totalorder %s77, %s79
    %p86 = scmp.eq.s32.totalorder %s15, 1
    %p87 = por %p85, %p86
    %p88 = scmp.ne.s32.totalorder %s79, %s80
    %p89 = scmp.eq.s32.totalorder %s15, 0
    %p90 = por %p88, %p89
    %p91 = scmp.ne.s32.totalorder %s79, %s80
    %p92 = scmp.eq.s32.totalorder %s16, 1
    %p93 = por %p91, %p92
    %p95 = scmp.ne.s32.totalorder %s80, %s94
    %p96 = scmp.eq.s32.totalorder %s16, 0
    %p97 = por %p95, %p96
    %s98 = ssub.s32 %s17, %s29
    %s99 = ssub.s32 %s18, %s25
    %s100 = sor.u32 %s98, %s99
    %p101 = scmp.eq.s32.totalorder %s100, 0
    %s103 = sadd.s32 %s102, 1
    %s104 = scalar_select %p101, %s102, %s103
    %p107 = pneg %p101
    %p108 = scmp.eq.s32.totalorder %s10, 1
    %p109 = por %p107, %p108
    %p110 = scmp.ne.s32.totalorder %s102, %s105
    %p111 = scmp.eq.s32.totalorder %s10, 0
    %p112 = por %p110, %p111
    %p113 = scmp.ne.s32.totalorder %s102, %s105
    %p114 = scmp.eq.s32.totalorder %s15, 1
    %p115 = por %p113, %p114
    %p116 = scmp.ne.s32.totalorder %s105, %s106
    %p117 = scmp.eq.s32.totalorder %s15, 0
    %p118 = por %p116, %p117
    %p119 = scmp.ne.s32.totalorder %s105, %s106
    %p120 = scmp.eq.s32.totalorder %s16, 1
    %p121 = por %p119, %p120
    %p123 = scmp.ne.s32.totalorder %s106, %s122
    %p124 = scmp.eq.s32.totalorder %s16, 0
    %p125 = por %p123, %p124
    %s126 = ssub.s32 %s17, %s29
    %s127 = ssub.s32 %s18, %s25
    %s128 = sor.u32 %s126, %s127
    %p129 = scmp.eq.s32.totalorder %s128, 0
    %s131 = sadd.s32 %s130, 1
    %s132 = scalar_select %p129, %s130, %s131
    %p135 = pneg %p129
    %p136 = scmp.eq.s32.totalorder %s10, 1
    %p137 = por %p135, %p136
    %p138 = scmp.ne.s32.totalorder %s130, %s133
    %p139 = scmp.eq.s32.totalorder %s10, 0
    %p140 = por %p138, %p139
    %p141 = scmp.ne.s32.totalorder %s130, %s133
    %p142 = scmp.eq.s32.totalorder %s15, 1
    %p143 = por %p141, %p142
    %p144 = scmp.ne.s32.totalorder %s133, %s134
    %p145 = scmp.eq.s32.totalorder %s15, 0
    %p146 = por %p144, %p145
    %p147 = scmp.ne.s32.totalorder %s133, %s134
    %p148 = scmp.eq.s32.totalorder %s16, 1
    %p149 = por %p147, %p148
    %p151 = scmp.ne.s32.totalorder %s134, %s150
    %p152 = scmp.eq.s32.totalorder %s16, 0
    %p153 = por %p151, %p152
    %p154 = scmp.le.s32.totalorder 1, %s10
    %p155 = scmp.lt.s32.totalorder %s10, 3
    %p156 = pnand %p154, %p155
    %p157 = pneg %p156
    // Predicated region
    $region9: #{conv_transpose_add_relu2d.1} parent=5 // pred_check
      _
    $region10: #{conv_transpose_add_relu2d.1} parent=5 // pred_check_branch
      %159 = sbr.rel (%p156) target = $region12
    $region11: #{conv_transpose_add_relu2d.1} parent=5 // pred_region
      %s160 = ssub.s32 %s10, 1
      // Predicated region
      $region13: #{conv_transpose_add_relu2d.1} parent=11 // pred_check
        %p161 = pneg %p69
      $region14: #{conv_transpose_add_relu2d.1} parent=11 // pred_check_branch
        %163 = sbr.rel (%p161) target = $region16
      $region15: #{conv_transpose_add_relu2d.1} parent=11 // pred_region
        _
      $region16: #{conv_transpose_add_relu2d.1} parent=11 // pred_fallthru
        _
      // Predicated region
      $region17: #{conv_transpose_add_relu2d.1} parent=11 // pred_check
        %p164 = pneg %p90
      $region18: #{conv_transpose_add_relu2d.1} parent=11 // pred_check_branch
        %166 = sbr.rel (%p164) target = $region20
      $region19: #{conv_transpose_add_relu2d.1} parent=11 // pred_region
        _
      $region20: #{conv_transpose_add_relu2d.1} parent=11 // pred_fallthru
        _
    $region12: #{conv_transpose_add_relu2d.1} parent=5 // pred_fallthru
      _
    %p167 = scmp.lt.s32.totalorder %s10, 2
    // Predicated region
    $region21: #{conv_transpose_add_relu2d.1} parent=5 // pred_check
      %p168 = pneg %p167
    $region22: #{conv_transpose_add_relu2d.1} parent=5 // pred_check_branch
      %170 = sbr.rel (%p168) target = $region24
    $region23: #{conv_transpose_add_relu2d.1} parent=5 // pred_region
      // Predicated region
      $region25: #{conv_transpose_add_relu2d.1} parent=23 // pred_check
        %p171 = pneg %p42
      $region26: #{conv_transpose_add_relu2d.1} parent=23 // pred_check_branch
        %173 = sbr.rel (%p171) target = $region28
      $region27: #{conv_transpose_add_relu2d.1} parent=23 // pred_region
        %p174 = scmp.lt.s32.totalorder %s17, 1
        %s175 = scalar_select %p174, %s17, 1
        %s176 = smul.addr %s175, 20
        %s177 = smul.addr %s176, 8
        %s178 = scalar_lea.vmem %s0, %s177
      $region28: #{conv_transpose_add_relu2d.1} parent=23 // pred_fallthru
        _
      // Predicated region
      $region29: #{conv_transpose_add_relu2d.1} parent=23 // pred_check
        %p179 = pneg %p112
      $region30: #{conv_transpose_add_relu2d.1} parent=23 // pred_check_branch
        %181 = sbr.rel (%p179) target = $region32
      $region31: #{conv_transpose_add_relu2d.1} parent=23 // pred_region
        %s182 = smul.u32 8, %s18
        %p183 = scmp.lt.s32.totalorder %s17, 1
        %s184 = scalar_select %p183, %s17, 1
        %p185 = scmp.lt.s32.totalorder %s182, 7
        %s186 = scalar_select %p185, %s182, 7
        %s187 = smul.addr %s184, 8
        %s188 = sadd.s32 %s186, %s187
        %s189 = smul.addr %s188, 8
        %s190 = scalar_lea.vmem %s3, %s189
        %s191 = smul.u32 8, %s18
      $region32: #{conv_transpose_add_relu2d.1} parent=23 // pred_fallthru
        _
    $region24: #{conv_transpose_add_relu2d.1} parent=5 // pred_fallthru
      _
    %p192 = scmp.le.s32.totalorder 1, %s10
    %p193 = scmp.lt.s32.totalorder %s10, 3
    %p194 = pnand %p192, %p193
    %p195 = pneg %p194
    // Predicated region
    $region33: #{conv_transpose_add_relu2d.1} parent=5 // pred_check
      _
    $region34: #{conv_transpose_add_relu2d.1} parent=5 // pred_check_branch
      %197 = sbr.rel (%p194) target = $region36
    $region35: #{conv_transpose_add_relu2d.1} parent=5 // pred_region
      %s198 = ssub.s32 %s10, 1
      %p199 = scmp.lt.s32.totalorder %s19, 1
      %s200 = scalar_select %p199, %s19, 1
      %s201 = smul.addr %s200, 20
      %s202 = smul.addr %s201, 8
      %s203 = scalar_lea.vmem %s0, %s202
      %p204 = pneg %p48
      %p205 = pneg %p45
      %p206 = pneg %p69
      %p207 = pneg %p66
      %p208 = pneg %p90
      %p209 = pneg %p87
      %s210 = smul.u32 8, %s20
      %p211 = scmp.lt.s32.totalorder %s19, 1
      %s212 = scalar_select %p211, %s19, 1
      %p213 = scmp.lt.s32.totalorder %s210, 7
      %s214 = scalar_select %p213, %s210, 7
      %s215 = smul.addr %s212, 8
      %s216 = sadd.s32 %s214, %s215
      %s217 = smul.addr %s216, 8
      %s218 = scalar_lea.vmem %s3, %s217
      %p219 = pneg %p118
      %p220 = pneg %p115
      %p221 = pneg %p146
      %p222 = pneg %p143
      %s223 = smul.u32 8, %s20
      %p224 = scmp.lt.s32.totalorder %s19, 1
      %s225 = scalar_select %p224, %s19, 1
      %p226 = scmp.lt.s32.totalorder %s223, 7
      %s227 = scalar_select %p226, %s223, 7
      %s228 = smul.addr %s225, 8
      %s229 = sadd.s32 %s227, %s228
      %s230 = smul.addr %s229, 8
      %s231 = scalar_lea.vmem %s4, %s230
      %p232 = scmp.lt.s32.totalorder %s19, 1
      %s233 = scalar_select %p232, %s19, 1
      %s234 = smul.addr %s233, 20
      %s235 = smul.addr %s234, 8
      %s236 = scalar_lea.vmem %s0, %s235
      %s237 = smul.u32 8, %s20
      %p238 = scmp.lt.s32.totalorder %s19, 1
      %s239 = scalar_select %p238, %s19, 1
      %p240 = scmp.lt.s32.totalorder %s237, 7
      %s241 = scalar_select %p240, %s237, 7
      %s242 = smul.addr %s239, 8
      %s243 = sadd.s32 %s241, %s242
      %s244 = smul.addr %s243, 8
      %s245 = scalar_lea.vmem %s3, %s244
      %s246 = smul.u32 8, %s20
      %s247 = smul.u32 8, %s20
      %p248 = scmp.lt.s32.totalorder %s19, 1
      %s249 = scalar_select %p248, %s19, 1
      %p250 = scmp.lt.s32.totalorder %s247, 7
      %s251 = scalar_select %p250, %s247, 7
      %s252 = smul.addr %s249, 8
      %s253 = sadd.s32 %s251, %s252
      %s254 = smul.addr %s253, 8
      %s255 = scalar_lea.vmem %s4, %s254
      %s256 = smul.u32 8, %s20
      %s257 = smul.u32 %s20, 8
      %v258 = vld [vmem:[%s245] sm:$0xff]
      %v259 = vld [vmem:[%s245 + $0x8] sm:$0xff]
      %v260 = vld [vmem:[%s245 + $0x10] sm:$0xff]
      %v261 = vld [vmem:[%s245 + $0x18] sm:$0xff]
      %v262 = vld [vmem:[%s245 + $0x20] sm:$0xff]
      %v263 = vld [vmem:[%s245 + $0x28] sm:$0xff]
      %v264 = vld [vmem:[%s245 + $0x30] sm:$0xff]
      %v265 = vld [vmem:[%s245 + $0x38] sm:$0xff]
      %v266 = vld [vmem:[%s2] sm:$0x1]
      %v268 = vperm.slane %v266, 0
      %v270 = vadd.f32 %v258, %v268
      %v271 = vadd.f32 %v259, %v268
      %v272 = vadd.f32 %v260, %v268
      %v273 = vadd.f32 %v261, %v268
      %v274 = vadd.f32 %v262, %v268
      %v275 = vadd.f32 %v263, %v268
      %v276 = vadd.f32 %v264, %v268
      %v277 = vadd.f32 %v265, %v268
      %s278 = smul.u32 %s257, 16
      %s279 = scalar_lea.vmem %s236, %s278
      %v280 = vld [vmem:[%s279] sm:$0xff]
      %v281 = vld [vmem:[%s279 + $0x10] sm:$0xff]
      %v282 = vld [vmem:[%s279 + $0x20] sm:$0xff]
      %v283 = vld [vmem:[%s279 + $0x30] sm:$0xff]
      %v284 = vld [vmem:[%s279 + $0x40] sm:$0xff]
      %v285 = vld [vmem:[%s279 + $0x50] sm:$0xff]
      %v286 = vld [vmem:[%s279 + $0x60] sm:$0xff]
      %v287 = vld [vmem:[%s279 + $0x70] sm:$0xff]
      %v288 = vld [vmem:[%s1] sm:$0xf]
      %vm289 = vcmask 31744
      %v291 = vsel %vm289, %v280, 0
      %v294 = vsel %vm289, %v281, 0
      %v297 = vsel %vm289, %v282, 0
      %v300 = vsel %vm289, %v283, 0
      %v303 = vsel %vm289, %v284, 0
      %v306 = vsel %vm289, %v285, 0
      %v309 = vsel %vm289, %v286, 0
      %v312 = vsel %vm289, %v287, 0
      %vm314 = vcmask 1043456
      %v316 = vsel %vm314, %v288, 0
      %318 = vmatpush.msra.mxu0 0.0
      %319 = vmatpush.msra.mxu0 0.0
      %320 = vmatpush.msra.mxu0 0.0
      %321 = vmatpush.msra.mxu0 0.0
      %322 = vmatpush.msra.mxu0 0.0
      %323 = vmatpush.msra.mxu0 0.0
      %324 = vmatpush.msra.mxu0 0.0
      %325 = vmatpush.msra.mxu0 0.0
      %326 = vmatpush.msra.mxu0 0.0
      %327 = vmatpush.msra.mxu0 0.0
      %328 = vmatpush.msra.mxu0 0.0
      %329 = vmatpush.msra.mxu0 0.0
      %330 = vmatpush.msra.mxu0 0.0
      %331 = vmatpush.msra.mxu0 0.0
      %332 = vmatpush.msra.mxu0 0.0
      %333 = vmatpush.msra.mxu0 %v316
      %334 = vmatmul.f32.gmra.mxu0 %v291
      %v335 = vpop.f32.mrf.mxu0
      %v336 = vadd.f32 0.0, %v335
      %337 = vmatmul.f32.gmra.mxu0 %v294
      %v338 = vpop.f32.mrf.mxu0
      %v339 = vadd.f32 0.0, %v338
      %340 = vmatmul.f32.gmra.mxu0 %v297
      %v341 = vpop.f32.mrf.mxu0
      %v342 = vadd.f32 0.0, %v341
      %343 = vmatmul.f32.gmra.mxu0 %v300
      %v344 = vpop.f32.mrf.mxu0
      %v345 = vadd.f32 0.0, %v344
      %346 = vmatmul.f32.gmra.mxu0 %v303
      %v347 = vpop.f32.mrf.mxu0
      %v348 = vadd.f32 0.0, %v347
      %349 = vmatmul.f32.gmra.mxu0 %v306
      %v350 = vpop.f32.mrf.mxu0
      %v351 = vadd.f32 0.0, %v350
      %352 = vmatmul.f32.gmra.mxu0 %v309
      %v353 = vpop.f32.mrf.mxu0
      %v354 = vadd.f32 0.0, %v353
      %355 = vmatmul.f32.gmra.mxu0 %v312
      %v356 = vpop.f32.mrf.mxu0
      %v357 = vadd.f32 0.0, %v356
      %358 = vdwg.mxu0
      %v359 = vadd.f32 %v270, %v336
      %v360 = vadd.f32 %v271, %v339
      %v361 = vadd.f32 %v272, %v342
      %v362 = vadd.f32 %v273, %v345
      %v363 = vadd.f32 %v274, %v348
      %v364 = vadd.f32 %v275, %v351
      %v365 = vadd.f32 %v276, %v354
      %v366 = vadd.f32 %v277, %v357
      %v367 = vld [vmem:[%s279 + $0x1] sm:$0xff]
      %v368 = vld [vmem:[%s279 + $0x11] sm:$0xff]
      %v369 = vld [vmem:[%s279 + $0x21] sm:$0xff]
      %v370 = vld [vmem:[%s279 + $0x31] sm:$0xff]
      %v371 = vld [vmem:[%s279 + $0x41] sm:$0xff]
      %v372 = vld [vmem:[%s279 + $0x51] sm:$0xff]
      %v373 = vld [vmem:[%s279 + $0x61] sm:$0xff]
      %v374 = vld [vmem:[%s279 + $0x71] sm:$0xff]
      %s375 = scalar_lea.vmem %s1, 4
      %v376 = vld [vmem:[%s375] sm:$0xf]
      %v378 = vsel %vm289, %v367, 0
      %v381 = vsel %vm289, %v368, 0
      %v384 = vsel %vm289, %v369, 0
      %v387 = vsel %vm289, %v370, 0
      %v390 = vsel %vm289, %v371, 0
      %v393 = vsel %vm289, %v372, 0
      %v396 = vsel %vm289, %v373, 0
      %v399 = vsel %vm289, %v374, 0
      %v402 = vsel %vm314, %v376, 0
      %404 = vmatpush.msra.mxu0 0.0
      %405 = vmatpush.msra.mxu0 0.0
      %406 = vmatpush.msra.mxu0 0.0
      %407 = vmatpush.msra.mxu0 0.0
      %408 = vmatpush.msra.mxu0 0.0
      %409 = vmatpush.msra.mxu0 0.0
      %410 = vmatpush.msra.mxu0 0.0
      %411 = vmatpush.msra.mxu0 0.0
      %412 = vmatpush.msra.mxu0 0.0
      %413 = vmatpush.msra.mxu0 0.0
      %414 = vmatpush.msra.mxu0 0.0
      %415 = vmatpush.msra.mxu0 0.0
      %416 = vmatpush.msra.mxu0 0.0
      %417 = vmatpush.msra.mxu0 0.0
      %418 = vmatpush.msra.mxu0 0.0
      %419 = vmatpush.msra.mxu0 %v402
      %420 = vmatmul.f32.gmra.mxu0 %v378
      %v421 = vpop.f32.mrf.mxu0
      %v422 = vadd.f32 0.0, %v421
      %423 = vmatmul.f32.gmra.mxu0 %v381
      %v424 = vpop.f32.mrf.mxu0
      %v425 = vadd.f32 0.0, %v424
      %426 = vmatmul.f32.gmra.mxu0 %v384
      %v427 = vpop.f32.mrf.mxu0
      %v428 = vadd.f32 0.0, %v427
      %429 = vmatmul.f32.gmra.mxu0 %v387
      %v430 = vpop.f32.mrf.mxu0
      %v431 = vadd.f32 0.0, %v430
      %432 = vmatmul.f32.gmra.mxu0 %v390
      %v433 = vpop.f32.mrf.mxu0
      %v434 = vadd.f32 0.0, %v433
      %435 = vmatmul.f32.gmra.mxu0 %v393
      %v436 = vpop.f32.mrf.mxu0
      %v437 = vadd.f32 0.0, %v436
      %438 = vmatmul.f32.gmra.mxu0 %v396
      %v439 = vpop.f32.mrf.mxu0
      %v440 = vadd.f32 0.0, %v439
      %441 = vmatmul.f32.gmra.mxu0 %v399
      %v442 = vpop.f32.mrf.mxu0
      %v443 = vadd.f32 0.0, %v442
      %444 = vdwg.mxu0
      %v445 = vadd.f32 %v359, %v422
      %v446 = vadd.f32 %v360, %v425
      %v447 = vadd.f32 %v361, %v428
      %v448 = vadd.f32 %v362, %v431
      %v449 = vadd.f32 %v363, %v434
      %v450 = vadd.f32 %v364, %v437
      %v451 = vadd.f32 %v365, %v440
      %v452 = vadd.f32 %v366, %v443
      %v453 = vld [vmem:[%s279 + $0x2] sm:$0xff]
      %v454 = vld [vmem:[%s279 + $0x12] sm:$0xff]
      %v455 = vld [vmem:[%s279 + $0x22] sm:$0xff]
      %v456 = vld [vmem:[%s279 + $0x32] sm:$0xff]
      %v457 = vld [vmem:[%s279 + $0x42] sm:$0xff]
      %v458 = vld [vmem:[%s279 + $0x52] sm:$0xff]
      %v459 = vld [vmem:[%s279 + $0x62] sm:$0xff]
      %v460 = vld [vmem:[%s279 + $0x72] sm:$0xff]
      %s461 = scalar_lea.vmem %s1, 8
      %v462 = vld [vmem:[%s461] sm:$0xf]
      %v464 = vsel %vm289, %v453, 0
      %v467 = vsel %vm289, %v454, 0
      %v470 = vsel %vm289, %v455, 0
      %v473 = vsel %vm289, %v456, 0
      %v476 = vsel %vm289, %v457, 0
      %v479 = vsel %vm289, %v458, 0
      %v482 = vsel %vm289, %v459, 0
      %v485 = vsel %vm289, %v460, 0
      %v488 = vsel %vm314, %v462, 0
      %490 = vmatpush.msra.mxu0 0.0
      %491 = vmatpush.msra.mxu0 0.0
      %492 = vmatpush.msra.mxu0 0.0
      %493 = vmatpush.msra.mxu0 0.0
      %494 = vmatpush.msra.mxu0 0.0
      %495 = vmatpush.msra.mxu0 0.0
      %496 = vmatpush.msra.mxu0 0.0
      %497 = vmatpush.msra.mxu0 0.0
      %498 = vmatpush.msra.mxu0 0.0
      %499 = vmatpush.msra.mxu0 0.0
      %500 = vmatpush.msra.mxu0 0.0
      %501 = vmatpush.msra.mxu0 0.0
      %502 = vmatpush.msra.mxu0 0.0
      %503 = vmatpush.msra.mxu0 0.0
      %504 = vmatpush.msra.mxu0 0.0
      %505 = vmatpush.msra.mxu0 %v488
      %506 = vmatmul.f32.gmra.mxu0 %v464
      %v507 = vpop.f32.mrf.mxu0
      %v508 = vadd.f32 0.0, %v507
      %509 = vmatmul.f32.gmra.mxu0 %v467
      %v510 = vpop.f32.mrf.mxu0
      %v511 = vadd.f32 0.0, %v510
      %512 = vmatmul.f32.gmra.mxu0 %v470
      %v513 = vpop.f32.mrf.mxu0
      %v514 = vadd.f32 0.0, %v513
      %515 = vmatmul.f32.gmra.mxu0 %v473
      %v516 = vpop.f32.mrf.mxu0
      %v517 = vadd.f32 0.0, %v516
      %518 = vmatmul.f32.gmra.mxu0 %v476
      %v519 = vpop.f32.mrf.mxu0
      %v520 = vadd.f32 0.0, %v519
      %521 = vmatmul.f32.gmra.mxu0 %v479
      %v522 = vpop.f32.mrf.mxu0
      %v523 = vadd.f32 0.0, %v522
      %524 = vmatmul.f32.gmra.mxu0 %v482
      %v525 = vpop.f32.mrf.mxu0
      %v526 = vadd.f32 0.0, %v525
      %527 = vmatmul.f32.gmra.mxu0 %v485
      %v528 = vpop.f32.mrf.mxu0
      %v529 = vadd.f32 0.0, %v528
      %530 = vdwg.mxu0
      %v531 = vadd.f32 %v445, %v508
      %v532 = vadd.f32 %v446, %v511
      %v533 = vadd.f32 %v447, %v514
      %v534 = vadd.f32 %v448, %v517
      %v535 = vadd.f32 %v449, %v520
      %v536 = vadd.f32 %v450, %v523
      %v537 = vadd.f32 %v451, %v526
      %v538 = vadd.f32 %v452, %v529
      %s539 = sadd.s32 %s257, 1
      %s540 = smul.u32 %s539, 16
      %s541 = scalar_lea.vmem %s236, %s540
      %v542 = vld [vmem:[%s541] sm:$0xff]
      %v543 = vld [vmem:[%s541 + $0x10] sm:$0xff]
      %v544 = vld [vmem:[%s541 + $0x20] sm:$0xff]
      %v545 = vld [vmem:[%s541 + $0x30] sm:$0xff]
      %v546 = vld [vmem:[%s541 + $0x40] sm:$0xff]
      %v547 = vld [vmem:[%s541 + $0x50] sm:$0xff]
      %v548 = vld [vmem:[%s541 + $0x60] sm:$0xff]
      %v549 = vld [vmem:[%s541 + $0x70] sm:$0xff]
      %s550 = scalar_lea.vmem %s1, 12
      %v551 = vld [vmem:[%s550] sm:$0xf]
      %v553 = vsel %vm289, %v542, 0
      %v556 = vsel %vm289, %v543, 0
      %v559 = vsel %vm289, %v544, 0
      %v562 = vsel %vm289, %v545, 0
      %v565 = vsel %vm289, %v546, 0
      %v568 = vsel %vm289, %v547, 0
      %v571 = vsel %vm289, %v548, 0
      %v574 = vsel %vm289, %v549, 0
      %v577 = vsel %vm314, %v551, 0
      %579 = vmatpush.msra.mxu0 0.0
      %580 = vmatpush.msra.mxu0 0.0
      %581 = vmatpush.msra.mxu0 0.0
      %582 = vmatpush.msra.mxu0 0.0
      %583 = vmatpush.msra.mxu0 0.0
      %584 = vmatpush.msra.mxu0 0.0
      %585 = vmatpush.msra.mxu0 0.0
      %586 = vmatpush.msra.mxu0 0.0
      %587 = vmatpush.msra.mxu0 0.0
      %588 = vmatpush.msra.mxu0 0.0
      %589 = vmatpush.msra.mxu0 0.0
      %590 = vmatpush.msra.mxu0 0.0
      %591 = vmatpush.msra.mxu0 0.0
      %592 = vmatpush.msra.mxu0 0.0
      %593 = vmatpush.msra.mxu0 0.0
      %594 = vmatpush.msra.mxu0 %v577
      %595 = vmatmul.f32.gmra.mxu0 %v553
      %v596 = vpop.f32.mrf.mxu0
      %v597 = vadd.f32 0.0, %v596
      %598 = vmatmul.f32.gmra.mxu0 %v556
      %v599 = vpop.f32.mrf.mxu0
      %v600 = vadd.f32 0.0, %v599
      %601 = vmatmul.f32.gmra.mxu0 %v559
      %v602 = vpop.f32.mrf.mxu0
      %v603 = vadd.f32 0.0, %v602
      %604 = vmatmul.f32.gmra.mxu0 %v562
      %v605 = vpop.f32.mrf.mxu0
      %v606 = vadd.f32 0.0, %v605
      %607 = vmatmul.f32.gmra.mxu0 %v565
      %v608 = vpop.f32.mrf.mxu0
      %v609 = vadd.f32 0.0, %v608
      %610 = vmatmul.f32.gmra.mxu0 %v568
      %v611 = vpop.f32.mrf.mxu0
      %v612 = vadd.f32 0.0, %v611
      %613 = vmatmul.f32.gmra.mxu0 %v571
      %v614 = vpop.f32.mrf.mxu0
      %v615 = vadd.f32 0.0, %v614
      %616 = vmatmul.f32.gmra.mxu0 %v574
      %v617 = vpop.f32.mrf.mxu0
      %v618 = vadd.f32 0.0, %v617
      %619 = vdwg.mxu0
      %v620 = vadd.f32 %v531, %v597
      %v621 = vadd.f32 %v532, %v600
      %v622 = vadd.f32 %v533, %v603
      %v623 = vadd.f32 %v534, %v606
      %v624 = vadd.f32 %v535, %v609
      %v625 = vadd.f32 %v536, %v612
      %v626 = vadd.f32 %v537, %v615
      %v627 = vadd.f32 %v538, %v618
      %v628 = vld [vmem:[%s541 + $0x1] sm:$0xff]
      %v629 = vld [vmem:[%s541 + $0x11] sm:$0xff]
      %v630 = vld [vmem:[%s541 + $0x21] sm:$0xff]
      %v631 = vld [vmem:[%s541 + $0x31] sm:$0xff]
      %v632 = vld [vmem:[%s541 + $0x41] sm:$0xff]
      %v633 = vld [vmem:[%s541 + $0x51] sm:$0xff]
      %v634 = vld [vmem:[%s541 + $0x61] sm:$0xff]
      %v635 = vld [vmem:[%s541 + $0x71] sm:$0xff]
      %s636 = scalar_lea.vmem %s1, 16
      %v637 = vld [vmem:[%s636] sm:$0xf]
      %v639 = vsel %vm289, %v628, 0
      %v642 = vsel %vm289, %v629, 0
      %v645 = vsel %vm289, %v630, 0
      %v648 = vsel %vm289, %v631, 0
      %v651 = vsel %vm289, %v632, 0
      %v654 = vsel %vm289, %v633, 0
      %v657 = vsel %vm289, %v634, 0
      %v660 = vsel %vm289, %v635, 0
      %v663 = vsel %vm314, %v637, 0
      %665 = vmatpush.msra.mxu0 0.0
      %666 = vmatpush.msra.mxu0 0.0
      %667 = vmatpush.msra.mxu0 0.0
      %668 = vmatpush.msra.mxu0 0.0
      %669 = vmatpush.msra.mxu0 0.0
      %670 = vmatpush.msra.mxu0 0.0
      %671 = vmatpush.msra.mxu0 0.0
      %672 = vmatpush.msra.mxu0 0.0
      %673 = vmatpush.msra.mxu0 0.0
      %674 = vmatpush.msra.mxu0 0.0
      %675 = vmatpush.msra.mxu0 0.0
      %676 = vmatpush.msra.mxu0 0.0
      %677 = vmatpush.msra.mxu0 0.0
      %678 = vmatpush.msra.mxu0 0.0
      %679 = vmatpush.msra.mxu0 0.0
      %680 = vmatpush.msra.mxu0 %v663
      %681 = vmatmul.f32.gmra.mxu0 %v639
      %v682 = vpop.f32.mrf.mxu0
      %v683 = vadd.f32 0.0, %v682
      %684 = vmatmul.f32.gmra.mxu0 %v642
      %v685 = vpop.f32.mrf.mxu0
      %v686 = vadd.f32 0.0, %v685
      %687 = vmatmul.f32.gmra.mxu0 %v645
      %v688 = vpop.f32.mrf.mxu0
      %v689 = vadd.f32 0.0, %v688
      %690 = vmatmul.f32.gmra.mxu0 %v648
      %v691 = vpop.f32.mrf.mxu0
      %v692 = vadd.f32 0.0, %v691
      %693 = vmatmul.f32.gmra.mxu0 %v651
      %v694 = vpop.f32.mrf.mxu0
      %v695 = vadd.f32 0.0, %v694
      %696 = vmatmul.f32.gmra.mxu0 %v654
      %v697 = vpop.f32.mrf.mxu0
      %v698 = vadd.f32 0.0, %v697
      %699 = vmatmul.f32.gmra.mxu0 %v657
      %v700 = vpop.f32.mrf.mxu0
      %v701 = vadd.f32 0.0, %v700
      %702 = vmatmul.f32.gmra.mxu0 %v660
      %v703 = vpop.f32.mrf.mxu0
      %v704 = vadd.f32 0.0, %v703
      %705 = vdwg.mxu0
      %v706 = vadd.f32 %v620, %v683
      %v707 = vadd.f32 %v621, %v686
      %v708 = vadd.f32 %v622, %v689
      %v709 = vadd.f32 %v623, %v692
      %v710 = vadd.f32 %v624, %v695
      %v711 = vadd.f32 %v625, %v698
      %v712 = vadd.f32 %v626, %v701
      %v713 = vadd.f32 %v627, %v704
      %v714 = vld [vmem:[%s541 + $0x2] sm:$0xff]
      %v715 = vld [vmem:[%s541 + $0x12] sm:$0xff]
      %v716 = vld [vmem:[%s541 + $0x22] sm:$0xff]
      %v717 = vld [vmem:[%s541 + $0x32] sm:$0xff]
      %v718 = vld [vmem:[%s541 + $0x42] sm:$0xff]
      %v719 = vld [vmem:[%s541 + $0x52] sm:$0xff]
      %v720 = vld [vmem:[%s541 + $0x62] sm:$0xff]
      %v721 = vld [vmem:[%s541 + $0x72] sm:$0xff]
      %s722 = scalar_lea.vmem %s1, 20
      %v723 = vld [vmem:[%s722] sm:$0xf]
      %v725 = vsel %vm289, %v714, 0
      %v728 = vsel %vm289, %v715, 0
      %v731 = vsel %vm289, %v716, 0
      %v734 = vsel %vm289, %v717, 0
      %v737 = vsel %vm289, %v718, 0
      %v740 = vsel %vm289, %v719, 0
      %v743 = vsel %vm289, %v720, 0
      %v746 = vsel %vm289, %v721, 0
      %v749 = vsel %vm314, %v723, 0
      %751 = vmatpush.msra.mxu0 0.0
      %752 = vmatpush.msra.mxu0 0.0
      %753 = vmatpush.msra.mxu0 0.0
      %754 = vmatpush.msra.mxu0 0.0
      %755 = vmatpush.msra.mxu0 0.0
      %756 = vmatpush.msra.mxu0 0.0
      %757 = vmatpush.msra.mxu0 0.0
      %758 = vmatpush.msra.mxu0 0.0
      %759 = vmatpush.msra.mxu0 0.0
      %760 = vmatpush.msra.mxu0 0.0
      %761 = vmatpush.msra.mxu0 0.0
      %762 = vmatpush.msra.mxu0 0.0
      %763 = vmatpush.msra.mxu0 0.0
      %764 = vmatpush.msra.mxu0 0.0
      %765 = vmatpush.msra.mxu0 0.0
      %766 = vmatpush.msra.mxu0 %v749
      %767 = vmatmul.f32.gmra.mxu0 %v725
      %v768 = vpop.f32.mrf.mxu0
      %v769 = vadd.f32 0.0, %v768
      %770 = vmatmul.f32.gmra.mxu0 %v728
      %v771 = vpop.f32.mrf.mxu0
      %v772 = vadd.f32 0.0, %v771
      %773 = vmatmul.f32.gmra.mxu0 %v731
      %v774 = vpop.f32.mrf.mxu0
      %v775 = vadd.f32 0.0, %v774
      %776 = vmatmul.f32.gmra.mxu0 %v734
      %v777 = vpop.f32.mrf.mxu0
      %v778 = vadd.f32 0.0, %v777
      %779 = vmatmul.f32.gmra.mxu0 %v737
      %v780 = vpop.f32.mrf.mxu0
      %v781 = vadd.f32 0.0, %v780
      %782 = vmatmul.f32.gmra.mxu0 %v740
      %v783 = vpop.f32.mrf.mxu0
      %v784 = vadd.f32 0.0, %v783
      %785 = vmatmul.f32.gmra.mxu0 %v743
      %v786 = vpop.f32.mrf.mxu0
      %v787 = vadd.f32 0.0, %v786
      %788 = vmatmul.f32.gmra.mxu0 %v746
      %v789 = vpop.f32.mrf.mxu0
      %v790 = vadd.f32 0.0, %v789
      %791 = vdwg.mxu0
      %v792 = vadd.f32 %v706, %v769
      %v793 = vadd.f32 %v707, %v772
      %v794 = vadd.f32 %v708, %v775
      %v795 = vadd.f32 %v709, %v778
      %v796 = vadd.f32 %v710, %v781
      %v797 = vadd.f32 %v711, %v784
      %v798 = vadd.f32 %v712, %v787
      %v799 = vadd.f32 %v713, %v790
      %s800 = sadd.s32 %s257, 2
      %s801 = smul.u32 %s800, 16
      %s802 = scalar_lea.vmem %s236, %s801
      %v803 = vld [vmem:[%s802] sm:$0xff]
      %v804 = vld [vmem:[%s802 + $0x10] sm:$0xff]
      %v805 = vld [vmem:[%s802 + $0x20] sm:$0xff]
      %v806 = vld [vmem:[%s802 + $0x30] sm:$0xff]
      %v807 = vld [vmem:[%s802 + $0x40] sm:$0xff]
      %v808 = vld [vmem:[%s802 + $0x50] sm:$0xff]
      %v809 = vld [vmem:[%s802 + $0x60] sm:$0xff]
      %v810 = vld [vmem:[%s802 + $0x70] sm:$0xff]
      %s811 = scalar_lea.vmem %s1, 24
      %v812 = vld [vmem:[%s811] sm:$0xf]
      %v814 = vsel %vm289, %v803, 0
      %v817 = vsel %vm289, %v804, 0
      %v820 = vsel %vm289, %v805, 0
      %v823 = vsel %vm289, %v806, 0
      %v826 = vsel %vm289, %v807, 0
      %v829 = vsel %vm289, %v808, 0
      %v832 = vsel %vm289, %v809, 0
      %v835 = vsel %vm289, %v810, 0
      %v838 = vsel %vm314, %v812, 0
      %840 = vmatpush.msra.mxu0 0.0
      %841 = vmatpush.msra.mxu0 0.0
      %842 = vmatpush.msra.mxu0 0.0
      %843 = vmatpush.msra.mxu0 0.0
      %844 = vmatpush.msra.mxu0 0.0
      %845 = vmatpush.msra.mxu0 0.0
      %846 = vmatpush.msra.mxu0 0.0
      %847 = vmatpush.msra.mxu0 0.0
      %848 = vmatpush.msra.mxu0 0.0
      %849 = vmatpush.msra.mxu0 0.0
      %850 = vmatpush.msra.mxu0 0.0
      %851 = vmatpush.msra.mxu0 0.0
      %852 = vmatpush.msra.mxu0 0.0
      %853 = vmatpush.msra.mxu0 0.0
      %854 = vmatpush.msra.mxu0 0.0
      %855 = vmatpush.msra.mxu0 %v838
      %856 = vmatmul.f32.gmra.mxu0 %v814
      %v857 = vpop.f32.mrf.mxu0
      %v858 = vadd.f32 0.0, %v857
      %859 = vmatmul.f32.gmra.mxu0 %v817
      %v860 = vpop.f32.mrf.mxu0
      %v861 = vadd.f32 0.0, %v860
      %862 = vmatmul.f32.gmra.mxu0 %v820
      %v863 = vpop.f32.mrf.mxu0
      %v864 = vadd.f32 0.0, %v863
      %865 = vmatmul.f32.gmra.mxu0 %v823
      %v866 = vpop.f32.mrf.mxu0
      %v867 = vadd.f32 0.0, %v866
      %868 = vmatmul.f32.gmra.mxu0 %v826
      %v869 = vpop.f32.mrf.mxu0
      %v870 = vadd.f32 0.0, %v869
      %871 = vmatmul.f32.gmra.mxu0 %v829
      %v872 = vpop.f32.mrf.mxu0
      %v873 = vadd.f32 0.0, %v872
      %874 = vmatmul.f32.gmra.mxu0 %v832
      %v875 = vpop.f32.mrf.mxu0
      %v876 = vadd.f32 0.0, %v875
      %877 = vmatmul.f32.gmra.mxu0 %v835
      %v878 = vpop.f32.mrf.mxu0
      %v879 = vadd.f32 0.0, %v878
      %880 = vdwg.mxu0
      %v881 = vadd.f32 %v792, %v858
      %v882 = vadd.f32 %v793, %v861
      %v883 = vadd.f32 %v794, %v864
      %v884 = vadd.f32 %v795, %v867
      %v885 = vadd.f32 %v796, %v870
      %v886 = vadd.f32 %v797, %v873
      %v887 = vadd.f32 %v798, %v876
      %v888 = vadd.f32 %v799, %v879
      %v889 = vld [vmem:[%s802 + $0x1] sm:$0xff]
      %v890 = vld [vmem:[%s802 + $0x11] sm:$0xff]
      %v891 = vld [vmem:[%s802 + $0x21] sm:$0xff]
      %v892 = vld [vmem:[%s802 + $0x31] sm:$0xff]
      %v893 = vld [vmem:[%s802 + $0x41] sm:$0xff]
      %v894 = vld [vmem:[%s802 + $0x51] sm:$0xff]
      %v895 = vld [vmem:[%s802 + $0x61] sm:$0xff]
      %v896 = vld [vmem:[%s802 + $0x71] sm:$0xff]
      %s897 = scalar_lea.vmem %s1, 28
      %v898 = vld [vmem:[%s897] sm:$0xf]
      %v900 = vsel %vm289, %v889, 0
      %v903 = vsel %vm289, %v890, 0
      %v906 = vsel %vm289, %v891, 0
      %v909 = vsel %vm289, %v892, 0
      %v912 = vsel %vm289, %v893, 0
      %v915 = vsel %vm289, %v894, 0
      %v918 = vsel %vm289, %v895, 0
      %v921 = vsel %vm289, %v896, 0
      %v924 = vsel %vm314, %v898, 0
      %926 = vmatpush.msra.mxu0 0.0
      %927 = vmatpush.msra.mxu0 0.0
      %928 = vmatpush.msra.mxu0 0.0
      %929 = vmatpush.msra.mxu0 0.0
      %930 = vmatpush.msra.mxu0 0.0
      %931 = vmatpush.msra.mxu0 0.0
      %932 = vmatpush.msra.mxu0 0.0
      %933 = vmatpush.msra.mxu0 0.0
      %934 = vmatpush.msra.mxu0 0.0
      %935 = vmatpush.msra.mxu0 0.0
      %936 = vmatpush.msra.mxu0 0.0
      %937 = vmatpush.msra.mxu0 0.0
      %938 = vmatpush.msra.mxu0 0.0
      %939 = vmatpush.msra.mxu0 0.0
      %940 = vmatpush.msra.mxu0 0.0
      %941 = vmatpush.msra.mxu0 %v924
      %942 = vmatmul.f32.gmra.mxu0 %v900
      %v943 = vpop.f32.mrf.mxu0
      %v944 = vadd.f32 0.0, %v943
      %945 = vmatmul.f32.gmra.mxu0 %v903
      %v946 = vpop.f32.mrf.mxu0
      %v947 = vadd.f32 0.0, %v946
      %948 = vmatmul.f32.gmra.mxu0 %v906
      %v949 = vpop.f32.mrf.mxu0
      %v950 = vadd.f32 0.0, %v949
      %951 = vmatmul.f32.gmra.mxu0 %v909
      %v952 = vpop.f32.mrf.mxu0
      %v953 = vadd.f32 0.0, %v952
      %954 = vmatmul.f32.gmra.mxu0 %v912
      %v955 = vpop.f32.mrf.mxu0
      %v956 = vadd.f32 0.0, %v955
      %957 = vmatmul.f32.gmra.mxu0 %v915
      %v958 = vpop.f32.mrf.mxu0
      %v959 = vadd.f32 0.0, %v958
      %960 = vmatmul.f32.gmra.mxu0 %v918
      %v961 = vpop.f32.mrf.mxu0
      %v962 = vadd.f32 0.0, %v961
      %963 = vmatmul.f32.gmra.mxu0 %v921
      %v964 = vpop.f32.mrf.mxu0
      %v965 = vadd.f32 0.0, %v964
      %966 = vdwg.mxu0
      %v967 = vadd.f32 %v881, %v944
      %v968 = vadd.f32 %v882, %v947
      %v969 = vadd.f32 %v883, %v950
      %v970 = vadd.f32 %v884, %v953
      %v971 = vadd.f32 %v885, %v956
      %v972 = vadd.f32 %v886, %v959
      %v973 = vadd.f32 %v887, %v962
      %v974 = vadd.f32 %v888, %v965
      %v975 = vld [vmem:[%s802 + $0x2] sm:$0xff]
      %v976 = vld [vmem:[%s802 + $0x12] sm:$0xff]
      %v977 = vld [vmem:[%s802 + $0x22] sm:$0xff]
      %v978 = vld [vmem:[%s802 + $0x32] sm:$0xff]
      %v979 = vld [vmem:[%s802 + $0x42] sm:$0xff]
      %v980 = vld [vmem:[%s802 + $0x52] sm:$0xff]
      %v981 = vld [vmem:[%s802 + $0x62] sm:$0xff]
      %v982 = vld [vmem:[%s802 + $0x72] sm:$0xff]
      %s983 = scalar_lea.vmem %s1, 32
      %v984 = vld [vmem:[%s983] sm:$0xf]
      %v986 = vsel %vm289, %v975, 0
      %v989 = vsel %vm289, %v976, 0
      %v992 = vsel %vm289, %v977, 0
      %v995 = vsel %vm289, %v978, 0
      %v998 = vsel %vm289, %v979, 0
      %v1001 = vsel %vm289, %v980, 0
      %v1004 = vsel %vm289, %v981, 0
      %v1007 = vsel %vm289, %v982, 0
      %v1010 = vsel %vm314, %v984, 0
      %1012 = vmatpush.msra.mxu0 0.0
      %1013 = vmatpush.msra.mxu0 0.0
      %1014 = vmatpush.msra.mxu0 0.0
      %1015 = vmatpush.msra.mxu0 0.0
      %1016 = vmatpush.msra.mxu0 0.0
      %1017 = vmatpush.msra.mxu0 0.0
      %1018 = vmatpush.msra.mxu0 0.0
      %1019 = vmatpush.msra.mxu0 0.0
      %1020 = vmatpush.msra.mxu0 0.0
      %1021 = vmatpush.msra.mxu0 0.0
      %1022 = vmatpush.msra.mxu0 0.0
      %1023 = vmatpush.msra.mxu0 0.0
      %1024 = vmatpush.msra.mxu0 0.0
      %1025 = vmatpush.msra.mxu0 0.0
      %1026 = vmatpush.msra.mxu0 0.0
      %1027 = vmatpush.msra.mxu0 %v1010
      %1028 = vmatmul.f32.gmra.mxu0 %v986
      %v1029 = vpop.f32.mrf.mxu0
      %v1030 = vadd.f32 0.0, %v1029
      %1031 = vmatmul.f32.gmra.mxu0 %v989
      %v1032 = vpop.f32.mrf.mxu0
      %v1033 = vadd.f32 0.0, %v1032
      %1034 = vmatmul.f32.gmra.mxu0 %v992
      %v1035 = vpop.f32.mrf.mxu0
      %v1036 = vadd.f32 0.0, %v1035
      %1037 = vmatmul.f32.gmra.mxu0 %v995
      %v1038 = vpop.f32.mrf.mxu0
      %v1039 = vadd.f32 0.0, %v1038
      %1040 = vmatmul.f32.gmra.mxu0 %v998
      %v1041 = vpop.f32.mrf.mxu0
      %v1042 = vadd.f32 0.0, %v1041
      %1043 = vmatmul.f32.gmra.mxu0 %v1001
      %v1044 = vpop.f32.mrf.mxu0
      %v1045 = vadd.f32 0.0, %v1044
      %1046 = vmatmul.f32.gmra.mxu0 %v1004
      %v1047 = vpop.f32.mrf.mxu0
      %v1048 = vadd.f32 0.0, %v1047
      %1049 = vmatmul.f32.gmra.mxu0 %v1007
      %v1050 = vpop.f32.mrf.mxu0
      %v1051 = vadd.f32 0.0, %v1050
      %1052 = vdwg.mxu0
      %v1053 = vadd.f32 %v967, %v1030
      %v1054 = vadd.f32 %v968, %v1033
      %v1055 = vadd.f32 %v969, %v1036
      %v1056 = vadd.f32 %v970, %v1039
      %v1057 = vadd.f32 %v971, %v1042
      %v1058 = vadd.f32 %v972, %v1045
      %v1059 = vadd.f32 %v973, %v1048
      %v1060 = vadd.f32 %v974, %v1051
      %v1061 = vmax.f32 %v1053, 0.0
      %v1062 = vmax.f32 %v1054, 0.0
      %v1063 = vmax.f32 %v1055, 0.0
      %v1064 = vmax.f32 %v1056, 0.0
      %v1065 = vmax.f32 %v1057, 0.0
      %v1066 = vmax.f32 %v1058, 0.0
      %v1067 = vmax.f32 %v1059, 0.0
      %v1068 = vmax.f32 %v1060, 0.0
      %1069 = vst [vmem:[%s255] sm:$0xff] %v1061
      %1070 = vst [vmem:[%s255 + $0x8] sm:$0xff] %v1062
      %1071 = vst [vmem:[%s255 + $0x10] sm:$0xff] %v1063
      %1072 = vst [vmem:[%s255 + $0x18] sm:$0xff] %v1064
      %1073 = vst [vmem:[%s255 + $0x20] sm:$0xff] %v1065
      %1074 = vst [vmem:[%s255 + $0x28] sm:$0xff] %v1066
      %1075 = vst [vmem:[%s255 + $0x30] sm:$0xff] %v1067
      %1076 = vst [vmem:[%s255 + $0x38] sm:$0xff] %v1068
      %s1077 = smul.u32 8, %s20
      %p1078 = scmp.lt.s32.totalorder %s19, 1
      %s1079 = scalar_select %p1078, %s19, 1
      %p1080 = scmp.lt.s32.totalorder %s1077, 7
      %s1081 = scalar_select %p1080, %s1077, 7
      %s1082 = smul.addr %s1079, 8
      %s1083 = sadd.s32 %s1081, %s1082
      %s1084 = smul.addr %s1083, 8
      %s1085 = scalar_lea.vmem %s4, %s1084
      // Predicated region
      $region37: #{conv_transpose_add_relu2d.1} parent=35 // pred_check
        %p1086 = pneg %p143
      $region38: #{conv_transpose_add_relu2d.1} parent=35 // pred_check_branch
        %1088 = sbr.rel (%p1086) target = $region40
      $region39: #{conv_transpose_add_relu2d.1} parent=35 // pred_region
        %s1089 = smul.u32 8, %s20
      $region40: #{conv_transpose_add_relu2d.1} parent=35 // pred_fallthru
        _
    $region36: #{conv_transpose_add_relu2d.1} parent=5 // pred_fallthru
      _
    %p1090 = scmp.le.s32.totalorder 2, %s10
    // Predicated region
    $region41: #{conv_transpose_add_relu2d.1} parent=5 // pred_check
      %p1091 = pneg %p1090
    $region42: #{conv_transpose_add_relu2d.1} parent=5 // pred_check_branch
      %1093 = sbr.rel (%p1091) target = $region44
    $region43: #{conv_transpose_add_relu2d.1} parent=5 // pred_region
      %s1094 = ssub.s32 %s10, 2
      // Predicated region
      $region45: #{conv_transpose_add_relu2d.1} parent=43 // pred_check
        %p1095 = pneg %p149
      $region46: #{conv_transpose_add_relu2d.1} parent=43 // pred_check_branch
        %1097 = sbr.rel (%p1095) target = $region48
      $region47: #{conv_transpose_add_relu2d.1} parent=43 // pred_region
        %s1098 = smul.u32 8, %s22
        %p1099 = scmp.lt.s32.totalorder %s21, 1
        %s1100 = scalar_select %p1099, %s21, 1
        %p1101 = scmp.lt.s32.totalorder %s1098, 7
        %s1102 = scalar_select %p1101, %s1098, 7
        %s1103 = smul.addr %s1100, 8
        %s1104 = sadd.s32 %s1102, %s1103
        %s1105 = smul.addr %s1104, 8
        %s1106 = scalar_lea.vmem %s4, %s1105
      $region48: #{conv_transpose_add_relu2d.1} parent=43 // pred_fallthru
        _
    $region44: #{conv_transpose_add_relu2d.1} parent=5 // pred_fallthru
      _
  $region6: #{conv_transpose_add_relu2d.1} parent=0 // loop_footer
    %s14 = sadd.s32 1, %s10
  $region7: #{conv_transpose_add_relu2d.1} parent=0 // loop_footer_branch
    %9 = sbr.rel target = $region3
  $region8: #{conv_transpose_add_relu2d.1} parent=0 // loop_exit
    _

</llo_original>
